<compile_context>
chip_gen: v6e
topology: v6e:2x2x1
jax: 0.10.0
libtpu: 0.0.40
codegen_flags: <defaults>
</compile_context>

<pallas_src>
import functools

import jax
import jax.numpy as jnp
from jax.experimental import pallas as pl
from jax.experimental.pallas import tpu as pltpu

_LANE = 128
_SUBLANE = 8
_TILE_TARGET_BYTES = 4 * 1024 * 1024     # input tile size target (~4 MiB)
_CHUNK_F32_BYTES = 2 * 1024 * 1024       # per-chunk widened-temporary budget


def _density_loss_kernel(inp_ref, lab_col_ref, lab_row_ref, out_ref, *,
                         sub, chunk, num_chunks):
    """One grid step = one (TM, N) row tile -> one partial sum of masked logs."""
    lab_row = lab_row_ref[...]                      # (1, N) int32 (resident block)
    n_cols = lab_row.shape[-1]

    def fold(x_raw, lab):
        # widen -> log -> select -> sublane-group fold ((chunk,N) -> (sub,N)).
        # All VPU/EUP work; masking stays a true select so NaN/-inf from padded
        # rows of a ragged last tile is discarded, never propagated.
        log_x = jnp.log(x_raw.astype(jnp.float32) + 1e-8)          # EUP
        contrib = jnp.where(lab == lab_row, log_x, 0.0)            # VPU select
        return contrib.reshape(chunk // sub, sub, n_cols).sum(axis=0)

    if num_chunks == 1:
        acc = fold(inp_ref[...], lab_col_ref[...])
    else:
        def body(c, acc):
            r0 = pl.multiple_of(c * chunk, chunk)
            return acc + fold(inp_ref[pl.ds(r0, chunk), :],
                              lab_col_ref[pl.ds(r0, chunk), :])
        acc = jax.lax.fori_loop(
            0, num_chunks, body,
            jnp.zeros((sub, n_cols), jnp.float32),
            unroll=num_chunks <= 8)

    partial = jnp.sum(acc)                          # one XLU reduce per tile
    out_ref[...] = jnp.broadcast_to(partial, out_ref.shape)


def _choose_tm(n, itemsize, target_bytes=_TILE_TARGET_BYTES):
    """Row-tile size: ~4 MiB lane-dense tiles, sublane-legal for every N."""
    if n < _SUBLANE:
        return n                                    # full sublane dim (always legal)
    tm = target_bytes // max(1, n * itemsize)
    if tm >= n:
        return n                                    # whole matrix fits in one tile
    if tm >= _LANE:
        return (tm // _LANE) * _LANE
    return max(_SUBLANE, (tm // _SUBLANE) * _SUBLANE)


def _choose_chunk(tm, sub, n, budget=_CHUNK_F32_BYTES):
    """Largest multiple of `sub` dividing tm whose f32-widened slab <= budget."""
    if tm % sub != 0 or tm == sub:
        return tm
    max_rows = max(sub, budget // max(1, n * 4))
    best = sub
    c = sub
    while c <= min(tm, max_rows):
        if tm % c == 0:
            best = c
        c += sub
    return best


def density_loss(inp, label, *, tm=None, chunk=None):
    """inp: (N, N) density/probability-like matrix, label: (N,) int labels."""
    n = inp.shape[0]
    assert inp.ndim == 2 and inp.shape == (n, n)
    itemsize = jnp.dtype(inp.dtype).itemsize

    if tm is None:
        tm = _choose_tm(n, itemsize)
    assert tm == n or tm % _SUBLANE == 0, "tm must be a multiple of 8 or equal N"

    sub = _SUBLANE if tm % _SUBLANE == 0 else tm
    if chunk is None:
        chunk = _choose_chunk(tm, sub, n)
    assert tm % chunk == 0 and chunk % sub == 0
    num_chunks = tm // chunk

    num_tiles = pl.cdiv(n, tm)
    padded_rows = num_tiles * tm

    # Column labels padded with a sentinel that can never equal a real label,
    # so padded/out-of-bounds rows of a ragged last tile contribute nothing.
    # (Assumes no genuine label equals int32 min.)
    sentinel = jnp.iinfo(jnp.int32).min
    lab = label.astype(jnp.int32)
    lab_col = jnp.full((padded_rows, 1), sentinel, dtype=jnp.int32)
    lab_col = lab_col.at[:n, 0].set(lab)
    lab_row = lab.reshape(1, n)

    kernel = functools.partial(_density_loss_kernel, sub=sub, chunk=chunk,
                               num_chunks=num_chunks)

    cost = pl.CostEstimate(
        flops=3 * n * n,                     # compare + select + add per element
        transcendentals=n * n,               # one log per element
        bytes_accessed=(n * n * itemsize + (padded_rows + n) * 4
                        + num_tiles * _SUBLANE * _LANE * 4),
    )

    partials = pl.pallas_call(
        kernel,
        out_shape=jax.ShapeDtypeStruct((num_tiles, _SUBLANE, _LANE), jnp.float32),
        grid=(num_tiles,),
        in_specs=[
            pl.BlockSpec((tm, n), lambda i: (i, 0)),   # lane-dense row tile
            pl.BlockSpec((tm, 1), lambda i: (i, 0)),   # (padded) labels for rows
            pl.BlockSpec((1, n), lambda i: (0, 0)),    # full label row (resident)
        ],
        out_specs=pl.BlockSpec((1, _SUBLANE, _LANE), lambda i: (i, 0, 0)),
        compiler_params=pltpu.CompilerParams(
            dimension_semantics=("parallel",),          # shard tiles across TCs (v7x)
            vmem_limit_bytes=32 * 1024 * 1024,
        ),
        cost_estimate=cost,
    )(inp, lab_col, lab_row)   # input streamed in native dtype, widened in VMEM

    # Tiny finalize in plain JAX: sum per-tile partials, negate, mean over rows.
    return -jnp.sum(partials[:, 0, 0]) / n


def _reference(inp, label):
    target = (label[:, None] == label[None, :]).astype(jnp.float32)
    log_input = jnp.log(inp.astype(jnp.float32) + 1e-8)
    return jnp.mean(jnp.sum(-target * log_input, axis=1))


if __name__ == "__main__":
    key = jax.random.PRNGKey(0)
    ks = jax.random.split(key, 8)

    # Case 1: small N, single tile, single chunk (module's tiny test shapes).
    n1 = 16
    inp1 = jax.random.uniform(ks[0], (n1, n1), jnp.float32, minval=0.05, maxval=1.0)
    lab1 = jax.random.randint(ks[1], (n1,), 0, 4, dtype=jnp.int32)
    out1 = jax.block_until_ready(density_loss(inp1, lab1))
    ref1 = _reference(inp1, lab1)
    assert jnp.allclose(out1, ref1, rtol=1e-5, atol=1e-5), (out1, ref1)

    # Case 2: multi-tile "parallel" grid with ragged (sentinel-masked) last tile.
    n2 = 200
    inp2 = jax.random.uniform(ks[2], (n2, n2), jnp.float32, minval=0.05, maxval=1.0)
    lab2 = jax.random.randint(ks[3], (n2,), 0, 7, dtype=jnp.int32)
    out2 = jax.block_until_ready(density_loss(inp2, lab2, tm=64))
    ref2 = _reference(inp2, lab2)
    assert jnp.allclose(out2, ref2, rtol=1e-4, atol=1e-4), (out2, ref2)

    # Case 3: chunked fori_loop path (num_chunks > 1) + ragged last tile.
    n3 = 100
    inp3 = jax.random.uniform(ks[4], (n3, n3), jnp.float32, minval=0.05, maxval=1.0)
    lab3 = jax.random.randint(ks[5], (n3,), 0, 5, dtype=jnp.int32)
    out3 = jax.block_until_ready(density_loss(inp3, lab3, tm=32, chunk=8))
    ref3 = _reference(inp3, lab3)
    assert jnp.allclose(out3, ref3, rtol=1e-4, atol=1e-4), (out3, ref3)

    # Case 4: N not a multiple of 8, whole matrix in one full-dim tile
    # (no monolithic-scratch fallback anymore).
    n4 = 20
    inp4 = jax.random.uniform(ks[6], (n4, n4), jnp.float32, minval=0.05, maxval=1.0)
    lab4 = jax.random.randint(ks[7], (n4,), 0, 3, dtype=jnp.int32)
    out4 = jax.block_until_ready(density_loss(inp4, lab4))
    ref4 = _reference(inp4, lab4)
    assert jnp.allclose(out4, ref4, rtol=1e-5, atol=1e-5), (out4, ref4)

    print("KERNEL_OK")
</pallas_src>

<mosaic_0001>
module attributes {stable_mosaic.version = 11 : i64} {
  func.func @_density_loss_kernel(%arg0: i32, %arg1: memref<16x16xf32, #tpu.memory_space<vmem>>, %arg2: memref<16x1xi32, #tpu.memory_space<vmem>>, %arg3: memref<1x16xi32, #tpu.memory_space<vmem>>, %arg4: memref<1x8x128xf32, #tpu.memory_space<vmem>>) attributes {dimension_semantics = [#tpu.dimension_semantics<parallel>], iteration_bounds = array<i64: 1>, scalar_prefetch = 0 : i64, scratch_operands = 0 : i64, tpu.core_type = #tpu.core_type<tc>, window_params = [{transform_indices = @transform_0, window_bounds = array<i64: 16, 16>}, {transform_indices = @transform_1, window_bounds = array<i64: 16, 1>}, {pipeline_mode = #tpu.pipeline_mode<synchronous>, transform_indices = @transform_2, window_bounds = array<i64: 1, 16>}, {transform_indices = @transform_3, window_bounds = array<i64: 1, 8, 128>}]} {
    %c0 = arith.constant 0 : index
    %c0_0 = arith.constant 0 : index
    %0 = vector.load %arg3[%c0, %c0_0] : memref<1x16xi32, #tpu.memory_space<vmem>>, vector<1x16xi32>
    %c0_1 = arith.constant 0 : index
    %c0_2 = arith.constant 0 : index
    %1 = vector.load %arg1[%c0_1, %c0_2] : memref<16x16xf32, #tpu.memory_space<vmem>>, vector<16x16xf32>
    %c0_3 = arith.constant 0 : index
    %c0_4 = arith.constant 0 : index
    %2 = vector.load %arg2[%c0_3, %c0_4] : memref<16x1xi32, #tpu.memory_space<vmem>>, vector<16x1xi32>
    %cst = arith.constant 9.99999993E-9 : f32
    %3 = vector.broadcast %cst : f32 to vector<16x16xf32>
    %4 = arith.addf %1, %3 : vector<16x16xf32>
    %5 = math.log %4 : vector<16x16xf32>
    %6 = vector.broadcast %2 : vector<16x1xi32> to vector<16x16xi32>
    %7 = vector.broadcast %0 : vector<1x16xi32> to vector<16x16xi32>
    %8 = arith.cmpi eq, %6, %7 : vector<16x16xi32>
    %cst_5 = arith.constant 0.000000e+00 : f32
    %9 = vector.broadcast %cst_5 : f32 to vector<16x16xf32>
    %10 = arith.select %8, %5, %9 : vector<16x16xi1>, vector<16x16xf32>
    %11 = vector.shape_cast %10 : vector<16x16xf32> to vector<2x8x16xf32>
    %cst_6 = arith.constant dense<0.000000e+00> : vector<8x16xf32>
    %12 = vector.multi_reduction <add>, %11, %cst_6 [0] : vector<2x8x16xf32> to vector<8x16xf32>
    %13 = vector.shape_cast %12 : vector<8x16xf32> to vector<1x8x16xf32>
    %cst_7 = arith.constant dense<0.000000e+00> : vector<1xf32>
    %14 = vector.multi_reduction <add>, %13, %cst_7 [1, 2] : vector<1x8x16xf32> to vector<1xf32>
    %15 = vector.shape_cast %14 : vector<1xf32> to vector<1x1x1xf32>
    %16 = vector.extract %15[0, 0, 0] : f32 from vector<1x1x1xf32>
    %17 = vector.broadcast %16 : f32 to vector<1x8x128xf32>
    %c0_8 = arith.constant 0 : index
    %c0_9 = arith.constant 0 : index
    %c0_10 = arith.constant 0 : index
    %18 = vector.load %arg4[%c0_8, %c0_9, %c0_10] : memref<1x8x128xf32, #tpu.memory_space<vmem>>, vector<1x8x128xf32>
    tpu.vector_store %arg4[%c0_8, %c0_9, %c0_10], %17 {strides = array<i32>} : memref<1x8x128xf32, #tpu.memory_space<vmem>>, vector<1x8x128xf32>,
    return
  }
  func.func @transform_0(%arg0: i32) -> (i32, i32) {
    %c0_i32 = arith.constant 0 : i32
    %c0_i32_0 = arith.constant 0 : i32
    return %arg0, %c0_i32 : i32, i32
  }
  func.func @transform_1(%arg0: i32) -> (i32, i32) {
    %c0_i32 = arith.constant 0 : i32
    %c0_i32_0 = arith.constant 0 : i32
    return %arg0, %c0_i32 : i32, i32
  }
  func.func @transform_2(%arg0: i32) -> (i32, i32) {
    %c0_i32 = arith.constant 0 : i32
    %c0_i32_0 = arith.constant 0 : i32
    %c0_i32_1 = arith.constant 0 : i32
    return %c0_i32, %c0_i32_0 : i32, i32
  }
  func.func @transform_3(%arg0: i32) -> (i32, i32, i32) {
    %c0_i32 = arith.constant 0 : i32
    %c0_i32_0 = arith.constant 0 : i32
    %c0_i32_1 = arith.constant 0 : i32
    return %arg0, %c0_i32, %c0_i32_0 : i32, i32, i32
  }
}

</mosaic_0001>

<llo_original>
// kernel: tpu_custom_call.1
$region0: #{tpu_custom_call.1}
  #allocation0 [shape = 'u32[]', space=smem, size = 0x4, offset = 0x4, fixed_abs, tag = 'smem constant byte address 0x4 - core index']
  #allocation1 [shape = 'u32[144,128]{1,0:T(1,128)}', space=vmem, size = 0x12000, scoped, tag = 'internal scratch']
  %s0 = inlined_call_operand.vmem [shape: f32[16,16], index: 0, kind: input, shape index: {}]
  %s1 = inlined_call_operand.vmem [shape: s32[16,1], index: 1, kind: input, shape index: {}]
  %s2 = inlined_call_operand.vmem [shape: s32[1,16], index: 2, kind: input, shape index: {}]
  %s3 = inlined_call_operand.hbm [shape: f32[1,8,128], index: 3, kind: output, shape index: {}]
  %s4 = sld [smem:[#allocation0]]
  $region22: #{tpu_custom_call.1} parent=0
    _
  %s6 = ssub.s32 1, %s4
  %s7 = scalar_select 0, %s6, %s4
  $region1: #{tpu_custom_call.1} parent=0
    #allocation2 [shape = 'u8[4096]{0}', space=vmem, size = 0x1000, scoped, tag = 'output window, operand 0, single buffered']
    #allocation3 [shape = 's32[1]{0}', space=sflag, size = 0x4, scoped, tag = 'scoped memory for tpu_custom_call.1']
    %8 = vsyncpa [#allocation3], 0
    // Predicated region
    $region2: #{tpu_custom_call.1} parent=1 // pred_check
      _
    $region3: #{tpu_custom_call.1} parent=1 // pred_check_branch
      %10 = sbr.rel (0) target = $region5
    $region4: #{tpu_custom_call.1} parent=1 // pred_region
      _
    $region5: #{tpu_custom_call.1} parent=1 // pred_fallthru
      _
    // Predicated region
    $region6: #{tpu_custom_call.1} parent=1 // pred_check
      _
    $region7: #{tpu_custom_call.1} parent=1 // pred_check_branch
      %12 = sbr.rel (0) target = $region9
    $region8: #{tpu_custom_call.1} parent=1 // pred_region
      _
    $region9: #{tpu_custom_call.1} parent=1 // pred_fallthru
      _
    // Predicated region
    $region10: #{tpu_custom_call.1} parent=1 // pred_check
      _
    $region11: #{tpu_custom_call.1} parent=1 // pred_check_branch
      %14 = sbr.rel (0) target = $region13
    $region12: #{tpu_custom_call.1} parent=1 // pred_region
      _
    $region13: #{tpu_custom_call.1} parent=1 // pred_fallthru
      _
    %v15 = vld [vmem:[%s2] sm:$0x1]
    %v16 = vld [vmem:[%s0] sm:$0xff]
    %v17 = vld [vmem:[%s0 + $0x8] sm:$0xff]
    %v18 = vld [vmem:[%s1] sm:$0xff]
    %v19 = vld [vmem:[%s1 + $0x8] sm:$0xff]
    %v20 = vadd.f32 %v16, 1e-08
    %v21 = vadd.f32 %v17, 1e-08
    %v22 = vlog2.pop %v20
    %v23 = vmul.f32 %v22, 0.6931472
    %v24 = vlog2.pop %v21
    %v25 = vmul.f32 %v24, 0.6931472
    %26 = vset.pattern.permute.xlu0 0
    %27 = vperm.xlu0 %26, %v18
    %v28 = vpop.permute.xlu0 %27
    %29 = vset.pattern.permute.xlu0 0
    %30 = vperm.xlu0 %29, %v19
    %v31 = vpop.permute.xlu0 %30
    %v32 = vlaneseq
    %v33 = vshrl.u32 %v32, 7
    %v34 = vsub.s32 0, %v33
    %v35 = vrot.slane %v15, %v34
    %vm36 = vcmp.eq.s32.totalorder %v28, %v35
    %vm37 = vcmp.eq.s32.totalorder %v31, %v35
    %v38 = vsel %vm36, %v23, 0.0
    %v39 = vsel %vm37, %v25, 0.0
    %vm40 = vcmask 130048
    %v41 = vsel %vm40, %v38, 0.0
    %v42 = vsel %vm40, %v39, 0.0
    %v43 = vadd.f32 %v41, %v42
    %v44 = vsel %vm40, %v43, 0.0
    %45 = vadd.xlane.f32.xlu0 %v44
    %v46 = vpop.xlane.xlu0 %45
    %v47 = vrot.slane %v46, 4
    %v48 = vadd.f32 %v46, %v47
    %v49 = vrot.slane %v48, 2
    %v50 = vadd.f32 %v48, %v49
    %v51 = vrot.slane %v50, 1
    %v52 = vadd.f32 %v50, %v51
    %s53 = vtos %v52
    %v54 = vstv %s53
    %55 = vst [vmem:[#allocation2] sm:$0xff] %v54
    // Predicated region
    $region14: #{tpu_custom_call.1} parent=1 // pred_check
      _
    $region15: #{tpu_custom_call.1} parent=1 // pred_check_branch
      %57 = sbr.rel (0) target = $region17
    $region16: #{tpu_custom_call.1} parent=1 // pred_region
      %s59 = ssub.s32 128, 128
      %60 = vsyncadd [#allocation3], %s59
      %s62 = sshll.u32 [#allocation2], 4
      %s63 = int_to_ptr.vmem [resolvable:$true] %s62
      %65 = dma.vmem_to_hbm [thread:$0]  %s63, 128, %s3, [#allocation3]
    $region17: #{tpu_custom_call.1} parent=1 // pred_fallthru
      _
    // Predicated region
    $region18: #{tpu_custom_call.1} parent=1 // pred_check
      _
    $region19: #{tpu_custom_call.1} parent=1 // pred_check_branch
      %67 = sbr.rel (0) target = $region21
    $region20: #{tpu_custom_call.1} parent=1 // pred_region
      %68 = dma.done [#allocation3], 128
    $region21: #{tpu_custom_call.1} parent=1 // pred_fallthru
      _
    %69 = vsyncpa [#allocation3], 1

</llo_original>
